<compile_context>
chip_gen: v6e
topology: v6e:2x2x1
jax: 0.10.0
libtpu: 0.0.40
codegen_flags: <defaults>
</compile_context>

<pallas_src>
import jax
import jax.numpy as jnp
from jax.experimental import pallas as pl
from jax.experimental.pallas import tpu as pltpu


# ----------------------------------------------------------------------------
# Kernel: transposed conv (2x2, stride 2) as a lane-dense matmul + bias
# ----------------------------------------------------------------------------
def _deconv_matmul_kernel(x_ref, w_ref, b_ref, o_ref):
    # x_ref: [Cin, tile_hw]     (pixels along lanes -> lane-dense loads)
    # w_ref: [Cout*4, Cin]      (resident across the grid)
    # b_ref: [Cout*4, 1]
    # o_ref: [Cout*4, tile_hw]  (lane-dense -> unmasked stores)
    acc = jnp.dot(w_ref[...], x_ref[...], preferred_element_type=jnp.float32)
    o_ref[...] = (acc + b_ref[...]).astype(o_ref.dtype)


def _pick_hw_tile(hw, per_col_bytes, budget_bytes=32 * 1024 * 1024):
    """Largest multiple-of-128 tile that divides hw and fits the VMEM budget."""
    max_cols = max(128, budget_bytes // max(per_col_bytes, 1))
    t = (min(hw, 2048, max_cols) // 128) * 128
    while t >= 128:
        if hw % t == 0:
            return t
        t -= 128
    # Fall back to the full row: a block dim equal to the array dim is always
    # legal even when it is not a multiple of 128 (small feature maps).
    return hw


def conv_transpose2d_2x2_s2(x, weight, bias):
    """nn.ConvTranspose2d(Cin, Cout, kernel_size=2, stride=2) forward.

    x:      [N, Cin, H, W]    (NCHW, like PyTorch)
    weight: [Cin, Cout, 2, 2] (PyTorch ConvTranspose2d layout)
    bias:   [Cout]
    returns [N, Cout, 2H, 2W]
    """
    N, Cin, H, W = x.shape
    Cout = weight.shape[1]
    Cout4 = Cout * 4
    HW = H * W

    # NCHW -> [N, Cin, H*W]: contiguous reshape, no HBM transpose pass.
    x_rows = x.reshape(N, Cin, HW)

    # Weight as [Cout*4, Cin], rows ordered (co, di, dj); bias repeated per tap.
    w_t = weight.transpose(1, 2, 3, 0).reshape(Cout4, Cin)
    b_t = jnp.repeat(bias, 4).reshape(Cout4, 1)

    itemsize = jnp.dtype(x.dtype).itemsize
    tw = _pick_hw_tile(HW, 2 * (Cin + Cout4) * itemsize)

    # Explicit VMEM budget: double-buffered x/out tiles + resident weight/bias,
    # kept comfortably below v7x's 64 MiB physical VMEM.
    vmem_est = 2 * (Cin * tw + Cout4 * tw + Cout4 * Cin + Cout4) * itemsize
    vmem_limit = int(min(48 * 1024 * 1024, max(32 * 1024 * 1024, 2 * vmem_est)))

    out = pl.pallas_call(
        _deconv_matmul_kernel,
        out_shape=jax.ShapeDtypeStruct((N, Cout4, HW), x.dtype),
        grid_spec=pltpu.PrefetchScalarGridSpec(
            num_scalar_prefetch=0,
            grid=(N, HW // tw),
            in_specs=[
                pl.BlockSpec((None, Cin, tw), lambda n, t: (n, 0, t)),
                pl.BlockSpec((Cout4, Cin), lambda n, t: (0, 0)),
                pl.BlockSpec((Cout4, 1), lambda n, t: (0, 0)),
            ],
            out_specs=pl.BlockSpec((None, Cout4, tw), lambda n, t: (n, 0, t)),
        ),
        compiler_params=pltpu.CompilerParams(
            dimension_semantics=("parallel", "parallel"),
            vmem_limit_bytes=vmem_limit,
        ),
    )(x_rows, w_t, b_t)

    # [N, Cout*4, H*W] -> NCHW [N, Cout, 2H, 2W]: one XLA copy of outputs2 only.
    # TODO(synk): fusing this 2x2 lane interleave into the kernel would need
    # lane-strided stores; left to XLA for lowering robustness.
    y = out.reshape(N, Cout, 2, 2, H, W)
    y = y.transpose(0, 1, 4, 2, 5, 3).reshape(N, Cout, 2 * H, 2 * W)
    return y


# ----------------------------------------------------------------------------
# unetUp forward (is_deconv=True)
# ----------------------------------------------------------------------------
def unet_up_forward(params, inputs1, inputs2):
    # outputs2 = self.up(inputs2)   (ConvTranspose2d 2x2 stride 2)
    outputs2 = conv_transpose2d_2x2_s2(inputs2, params["up_w"], params["up_b"])

    # offset / F.pad semantics; a no-op (free) in the usual offset == 0 case.
    offset = outputs2.shape[2] - inputs1.shape[2]
    p = offset // 2
    if p == 0:
        outputs1 = inputs1
    else:
        outputs1 = jnp.pad(inputs1, ((0, 0), (0, 0), (p, p), (p, p)))

    # torch.cat([outputs1, outputs2], dim=1): contiguous full-bandwidth copies.
    cat = jnp.concatenate([outputs1, outputs2], axis=1)

    # TODO(synk): self.conv is referenced in forward() but never defined in the
    # reference module's __init__, so we return the tensor it would receive.
    # TODO(synk): is_deconv=False (UpsamplingBilinear2d) branch not implemented.
    return cat


if __name__ == "__main__":
    key = jax.random.PRNGKey(0)
    k1, k2, k3, k4 = jax.random.split(key, 4)

    N = 2
    in_size, out_size = 8, 4          # ConvTranspose2d(in_size, out_size, 2, 2)
    H2 = W2 = 8                        # inputs2 (deep features) spatial
    H1 = W1 = 16                       # inputs1 (skip connection) spatial = 2*H2

    inputs1 = jax.random.normal(k1, (N, out_size, H1, W1), jnp.float32)
    inputs2 = jax.random.normal(k2, (N, in_size, H2, W2), jnp.float32)

    params = {
        "up_w": 0.1 * jax.random.normal(k3, (in_size, out_size, 2, 2), jnp.float32),
        "up_b": 0.1 * jax.random.normal(k4, (out_size,), jnp.float32),
    }

    out = jax.jit(unet_up_forward)(params, inputs1, inputs2)
    jax.block_until_ready(out)
    assert out.shape == (N, out_size + out_size, H1, W1), out.shape

    # Pure-JAX reference: ConvTranspose2d(k=2, s=2) + pad(0) + channel concat.
    taps = jnp.einsum("nchw,codk->nodkhw", inputs2, params["up_w"],
                      precision=jax.lax.Precision.HIGHEST)
    taps = taps + params["up_b"][None, :, None, None, None, None]
    ref2 = taps.transpose(0, 1, 4, 2, 5, 3).reshape(N, out_size, 2 * H2, 2 * W2)
    ref = jnp.concatenate([inputs1, ref2], axis=1)
    assert jnp.allclose(out, ref, rtol=2e-2, atol=2e-2), float(
        jnp.max(jnp.abs(out - ref)))

    print("KERNEL_OK")
</pallas_src>

<mosaic_0001>
module attributes {stable_mosaic.version = 11 : i64} {
  func.func @_deconv_matmul_kernel(%arg0: i32, %arg1: i32, %arg2: memref<1x8x64xf32, #tpu.memory_space<vmem>>, %arg3: memref<16x8xf32, #tpu.memory_space<vmem>>, %arg4: memref<16x1xf32, #tpu.memory_space<vmem>>, %arg5: memref<1x16x64xf32, #tpu.memory_space<vmem>>) attributes {dimension_semantics = [#tpu.dimension_semantics<parallel>, #tpu.dimension_semantics<parallel>], iteration_bounds = array<i64: 2, 1>, scalar_prefetch = 0 : i64, scratch_operands = 0 : i64, tpu.core_type = #tpu.core_type<tc>, window_params = [{transform_indices = @transform_0, window_bounds = array<i64: 1, 8, 64>}, {pipeline_mode = #tpu.pipeline_mode<synchronous>, transform_indices = @transform_1, window_bounds = array<i64: 16, 8>}, {pipeline_mode = #tpu.pipeline_mode<synchronous>, transform_indices = @transform_2, window_bounds = array<i64: 16, 1>}, {transform_indices = @transform_3, window_bounds = array<i64: 1, 16, 64>}]} {
    %c0 = arith.constant 0 : index
    %c0_0 = arith.constant 0 : index
    %0 = vector.load %arg3[%c0, %c0_0] : memref<16x8xf32, #tpu.memory_space<vmem>>, vector<16x8xf32>
    %c0_1 = arith.constant 0 : index
    %c0_2 = arith.constant 0 : index
    %c0_3 = arith.constant 0 : index
    %1 = vector.load %arg2[%c0_1, %c0_2, %c0_3] : memref<1x8x64xf32, #tpu.memory_space<vmem>>, vector<1x8x64xf32>
    %2 = vector.shape_cast %1 : vector<1x8x64xf32> to vector<8x64xf32>
    %cst = arith.constant dense<0.000000e+00> : vector<16x64xf32>
    %3 = tpu.matmul %0, %2, %cst {dimension_numbers = #tpu.dot_dimension_numbers<[1], [0], [0], [1], [0, 0, 1, 1], [], []>} : vector<16x8xf32>, vector<8x64xf32>, vector<16x64xf32> -> vector<16x64xf32>
    %c0_4 = arith.constant 0 : index
    %c0_5 = arith.constant 0 : index
    %4 = vector.load %arg4[%c0_4, %c0_5] : memref<16x1xf32, #tpu.memory_space<vmem>>, vector<16x1xf32>
    %5 = vector.broadcast %4 : vector<16x1xf32> to vector<16x64xf32>
    %6 = arith.addf %3, %5 : vector<16x64xf32>
    %c0_6 = arith.constant 0 : index
    %c0_7 = arith.constant 0 : index
    %c0_8 = arith.constant 0 : index
    %7 = vector.load %arg5[%c0_6, %c0_7, %c0_8] : memref<1x16x64xf32, #tpu.memory_space<vmem>>, vector<1x16x64xf32>
    %8 = vector.shape_cast %7 : vector<1x16x64xf32> to vector<16x64xf32>
    %9 = vector.shape_cast %6 : vector<16x64xf32> to vector<1x16x64xf32>
    tpu.vector_store %arg5[%c0_6, %c0_7, %c0_8], %9 {strides = array<i32>} : memref<1x16x64xf32, #tpu.memory_space<vmem>>, vector<1x16x64xf32>,
    return
  }
  func.func @transform_0(%arg0: i32, %arg1: i32) -> (i32, i32, i32) {
    %c0_i32 = arith.constant 0 : i32
    %c0_i32_0 = arith.constant 0 : i32
    return %arg0, %c0_i32, %arg1 : i32, i32, i32
  }
  func.func @transform_1(%arg0: i32, %arg1: i32) -> (i32, i32) {
    %c0_i32 = arith.constant 0 : i32
    %c0_i32_0 = arith.constant 0 : i32
    %c0_i32_1 = arith.constant 0 : i32
    return %c0_i32, %c0_i32_0 : i32, i32
  }
  func.func @transform_2(%arg0: i32, %arg1: i32) -> (i32, i32) {
    %c0_i32 = arith.constant 0 : i32
    %c0_i32_0 = arith.constant 0 : i32
    %c0_i32_1 = arith.constant 0 : i32
    return %c0_i32, %c0_i32_0 : i32, i32
  }
  func.func @transform_3(%arg0: i32, %arg1: i32) -> (i32, i32, i32) {
    %c0_i32 = arith.constant 0 : i32
    %c0_i32_0 = arith.constant 0 : i32
    return %arg0, %c0_i32, %arg1 : i32, i32, i32
  }
}

</mosaic_0001>

<llo_original>
// kernel: unet_up_forward.1
$region0: #{unet_up_forward.1}
  #allocation0 [shape = 'u32[]', space=smem, size = 0x4, offset = 0x4, fixed_abs, tag = 'smem constant byte address 0x4 - core index']
  #allocation1 [shape = 'u32[144,128]{1,0:T(1,128)}', space=vmem, size = 0x12000, scoped, tag = 'internal scratch']
  %s0 = inlined_call_operand.vmem [shape: f32[2,8,64], index: 0, kind: input, shape index: {}]
  %s1 = inlined_call_operand.vmem [shape: f32[16,8], index: 1, kind: input, shape index: {}]
  %s2 = inlined_call_operand.vmem [shape: f32[16,1], index: 2, kind: input, shape index: {}]
  %s3 = inlined_call_operand.vmem [shape: f32[2,16,64], index: 3, kind: output, shape index: {}]
  %s4 = sld [smem:[#allocation0]]
  $region45: #{unet_up_forward.1} parent=0
    _
  %s6 = ssub.s32 1, %s4
  %s7 = scalar_select 0, %s6, %s4
  loop: start=0, step=1, limit=4
  $region2: #{unet_up_forward.1} parent=0 // loop_pre_header
    _
  $region3: #{unet_up_forward.1} parent=0 // loop_header
    %s9 = sphi 0, %s13
    %p10 = scmp.ge.s32.totalorder %s9, 4
    %s16 = sphi 0, %s28
    %s17 = sphi 0, %s24
    %s18 = sphi 0, %s16
    %s19 = sphi 0, %s17
    %s20 = sphi 0, %s18
    %s21 = sphi 0, %s19
    %s33 = sphi 0, %s35
    %s36 = sphi 0, %s33
    %s37 = sphi 0, %s36
    %s53 = sphi 0, %s37
    %s57 = sphi 0, %s57
    %s59 = sphi 0, %s57
    %s60 = sphi 0, %s59
    %s74 = sphi 0, %s60
    %s78 = sphi 0, %s78
    %s80 = sphi 0, %s78
    %s81 = sphi 0, %s80
    %s95 = sphi 0, %s81
    %s103 = sphi 0, %s105
    %s106 = sphi 0, %s103
    %s107 = sphi 0, %s106
    %s123 = sphi 0, %s107
  $region4: #{unet_up_forward.1} parent=0 // loop_header_branch
    %12 = sbr.rel (%p10) target = $region8
  $region5: #{unet_up_forward.1} parent=0 // loop_body
    %s14 = ssub.s32 %s9, 1
    %s15 = ssub.s32 %s9, 2
    %s22 = sadd.s32 1, %s17
    %p23 = scmp.ge.s32.totalorder %s22, 1
    %s24 = scalar_select %p23, 0, %s22
    %s25 = sadd.s32 1, %s16
    %s26 = scalar_select %p23, %s25, %s16
    %p27 = scmp.ge.s32.totalorder %s26, 2
    %s28 = scalar_select %p27, 0, %s26
    %s29 = ssub.s32 %s16, %s28
    %s30 = ssub.s32 %s17, %s24
    %s31 = sor.u32 %s29, %s30
    %p32 = scmp.eq.s32.totalorder %s31, 0
    %s34 = sadd.s32 %s33, 1
    %s35 = scalar_select %p32, %s33, %s34
    %p38 = pneg %p32
    %p39 = scmp.eq.s32.totalorder %s9, 1
    %p40 = por %p38, %p39
    %p41 = scmp.ne.s32.totalorder %s33, %s36
    %p42 = scmp.eq.s32.totalorder %s9, 0
    %p43 = por %p41, %p42
    %p44 = scmp.ne.s32.totalorder %s33, %s36
    %p45 = scmp.eq.s32.totalorder %s14, 1
    %p46 = por %p44, %p45
    %p47 = scmp.ne.s32.totalorder %s36, %s37
    %p48 = scmp.eq.s32.totalorder %s14, 0
    %p49 = por %p47, %p48
    %p50 = scmp.ne.s32.totalorder %s36, %s37
    %p51 = scmp.eq.s32.totalorder %s15, 1
    %p52 = por %p50, %p51
    %p54 = scmp.ne.s32.totalorder %s37, %s53
    %p55 = scmp.eq.s32.totalorder %s15, 0
    %p56 = por %p54, %p55
    %s58 = sadd.s32 %s57, 1
    %p61 = scmp.eq.s32.totalorder %s9, 1
    %p62 = scmp.ne.s32.totalorder %s57, %s59
    %p63 = scmp.eq.s32.totalorder %s9, 0
    %p64 = por %p62, %p63
    %p65 = scmp.ne.s32.totalorder %s57, %s59
    %p66 = scmp.eq.s32.totalorder %s14, 1
    %p67 = por %p65, %p66
    %p68 = scmp.ne.s32.totalorder %s59, %s60
    %p69 = scmp.eq.s32.totalorder %s14, 0
    %p70 = por %p68, %p69
    %p71 = scmp.ne.s32.totalorder %s59, %s60
    %p72 = scmp.eq.s32.totalorder %s15, 1
    %p73 = por %p71, %p72
    %p75 = scmp.ne.s32.totalorder %s60, %s74
    %p76 = scmp.eq.s32.totalorder %s15, 0
    %p77 = por %p75, %p76
    %s79 = sadd.s32 %s78, 1
    %p82 = scmp.eq.s32.totalorder %s9, 1
    %p83 = scmp.ne.s32.totalorder %s78, %s80
    %p84 = scmp.eq.s32.totalorder %s9, 0
    %p85 = por %p83, %p84
    %p86 = scmp.ne.s32.totalorder %s78, %s80
    %p87 = scmp.eq.s32.totalorder %s14, 1
    %p88 = por %p86, %p87
    %p89 = scmp.ne.s32.totalorder %s80, %s81
    %p90 = scmp.eq.s32.totalorder %s14, 0
    %p91 = por %p89, %p90
    %p92 = scmp.ne.s32.totalorder %s80, %s81
    %p93 = scmp.eq.s32.totalorder %s15, 1
    %p94 = por %p92, %p93
    %p96 = scmp.ne.s32.totalorder %s81, %s95
    %p97 = scmp.eq.s32.totalorder %s15, 0
    %p98 = por %p96, %p97
    %s99 = ssub.s32 %s16, %s28
    %s100 = ssub.s32 %s17, %s24
    %s101 = sor.u32 %s99, %s100
    %p102 = scmp.eq.s32.totalorder %s101, 0
    %s104 = sadd.s32 %s103, 1
    %s105 = scalar_select %p102, %s103, %s104
    %p108 = pneg %p102
    %p109 = scmp.eq.s32.totalorder %s9, 1
    %p110 = por %p108, %p109
    %p111 = scmp.ne.s32.totalorder %s103, %s106
    %p112 = scmp.eq.s32.totalorder %s9, 0
    %p113 = por %p111, %p112
    %p114 = scmp.ne.s32.totalorder %s103, %s106
    %p115 = scmp.eq.s32.totalorder %s14, 1
    %p116 = por %p114, %p115
    %p117 = scmp.ne.s32.totalorder %s106, %s107
    %p118 = scmp.eq.s32.totalorder %s14, 0
    %p119 = por %p117, %p118
    %p120 = scmp.ne.s32.totalorder %s106, %s107
    %p121 = scmp.eq.s32.totalorder %s15, 1
    %p122 = por %p120, %p121
    %p124 = scmp.ne.s32.totalorder %s107, %s123
    %p125 = scmp.eq.s32.totalorder %s15, 0
    %p126 = por %p124, %p125
    %p127 = scmp.le.s32.totalorder 1, %s9
    %p128 = scmp.lt.s32.totalorder %s9, 3
    %p129 = pnand %p127, %p128
    %p130 = pneg %p129
    // Predicated region
    $region9: #{unet_up_forward.1} parent=5 // pred_check
      _
    $region10: #{unet_up_forward.1} parent=5 // pred_check_branch
      %132 = sbr.rel (%p129) target = $region12
    $region11: #{unet_up_forward.1} parent=5 // pred_region
      %s133 = ssub.s32 %s9, 1
      // Predicated region
      $region13: #{unet_up_forward.1} parent=11 // pred_check
        %p134 = pneg %p70
      $region14: #{unet_up_forward.1} parent=11 // pred_check_branch
        %136 = sbr.rel (%p134) target = $region16
      $region15: #{unet_up_forward.1} parent=11 // pred_region
        _
      $region16: #{unet_up_forward.1} parent=11 // pred_fallthru
        _
      // Predicated region
      $region17: #{unet_up_forward.1} parent=11 // pred_check
        %p137 = pneg %p91
      $region18: #{unet_up_forward.1} parent=11 // pred_check_branch
        %139 = sbr.rel (%p137) target = $region20
      $region19: #{unet_up_forward.1} parent=11 // pred_region
        _
      $region20: #{unet_up_forward.1} parent=11 // pred_fallthru
        _
    $region12: #{unet_up_forward.1} parent=5 // pred_fallthru
      _
    %p140 = scmp.lt.s32.totalorder %s9, 2
    // Predicated region
    $region21: #{unet_up_forward.1} parent=5 // pred_check
      %p141 = pneg %p140
    $region22: #{unet_up_forward.1} parent=5 // pred_check_branch
      %143 = sbr.rel (%p141) target = $region24
    $region23: #{unet_up_forward.1} parent=5 // pred_region
      // Predicated region
      $region25: #{unet_up_forward.1} parent=23 // pred_check
        %p144 = pneg %p43
      $region26: #{unet_up_forward.1} parent=23 // pred_check_branch
        %146 = sbr.rel (%p144) target = $region28
      $region27: #{unet_up_forward.1} parent=23 // pred_region
        %p147 = scmp.lt.s32.totalorder %s16, 1
        %s148 = scalar_select %p147, %s16, 1
        %p149 = scmp.lt.s32.totalorder %s17, 0
        %s150 = scalar_select %p149, %s17, 0
        %s151 = sadd.s32 %s150, %s148
        %s152 = smul.addr %s151, 8
        %s153 = scalar_lea.vmem %s0, %s152
      $region28: #{unet_up_forward.1} parent=23 // pred_fallthru
        _
    $region24: #{unet_up_forward.1} parent=5 // pred_fallthru
      _
    %p154 = scmp.le.s32.totalorder 1, %s9
    %p155 = scmp.lt.s32.totalorder %s9, 3
    %p156 = pnand %p154, %p155
    %p157 = pneg %p156
    // Predicated region
    $region29: #{unet_up_forward.1} parent=5 // pred_check
      _
    $region30: #{unet_up_forward.1} parent=5 // pred_check_branch
      %159 = sbr.rel (%p156) target = $region32
    $region31: #{unet_up_forward.1} parent=5 // pred_region
      %s160 = ssub.s32 %s9, 1
      %p161 = scmp.lt.s32.totalorder %s18, 1
      %s162 = scalar_select %p161, %s18, 1
      %p163 = scmp.lt.s32.totalorder %s19, 0
      %s164 = scalar_select %p163, %s19, 0
      %s165 = sadd.s32 %s164, %s162
      %s166 = smul.addr %s165, 8
      %s167 = scalar_lea.vmem %s0, %s166
      %p168 = pneg %p49
      %p169 = pneg %p46
      %p170 = pneg %p70
      %p171 = pneg %p67
      %p172 = pneg %p91
      %p173 = pneg %p88
      %p174 = pneg %p119
      %p175 = pneg %p116
      %p176 = scmp.lt.s32.totalorder %s18, 1
      %s177 = scalar_select %p176, %s18, 1
      %p178 = scmp.lt.s32.totalorder %s19, 0
      %s179 = scalar_select %p178, %s19, 0
      %s180 = smul.addr %s177, 2
      %s181 = sadd.s32 %s179, %s180
      %s182 = smul.addr %s181, 8
      %s183 = scalar_lea.vmem %s3, %s182
      %p184 = scmp.lt.s32.totalorder %s18, 1
      %s185 = scalar_select %p184, %s18, 1
      %p186 = scmp.lt.s32.totalorder %s19, 0
      %s187 = scalar_select %p186, %s19, 0
      %s188 = sadd.s32 %s187, %s185
      %s189 = smul.addr %s188, 8
      %s190 = scalar_lea.vmem %s0, %s189
      %p191 = scmp.lt.s32.totalorder %s18, 1
      %s192 = scalar_select %p191, %s18, 1
      %p193 = scmp.lt.s32.totalorder %s19, 0
      %s194 = scalar_select %p193, %s19, 0
      %s195 = smul.addr %s192, 2
      %s196 = sadd.s32 %s194, %s195
      %s197 = smul.addr %s196, 8
      %s198 = scalar_lea.vmem %s3, %s197
      %v199 = vld [vmem:[%s1] sm:$0xff]
      %v200 = vld [vmem:[%s1 + $0x8] sm:$0xff]
      %v201 = vld [vmem:[%s190] sm:$0xff]
      %v202 = vld [vmem:[%s2] sm:$0xff]
      %v203 = vld [vmem:[%s2 + $0x8] sm:$0xff]
      %205 = vset.pattern.permute.xlu0 0
      %206 = vperm.xlu0 %205, %v202
      %v207 = vpop.permute.xlu0 %206
      %210 = vset.pattern.permute.xlu0 0
      %211 = vperm.xlu0 %210, %v203
      %v212 = vpop.permute.xlu0 %211
      %vm214 = vcmask 64512
      %v216 = vsel %vm214, %v199, 0
      %v219 = vsel %vm214, %v200, 0
      %221 = vmatprep.subr.mxu0 0.0
      %222 = vmatpush1.msra.mxu0 0.0
      %223 = vmatprep.subr.mxu0 0.0
      %224 = vmatpush1.msra.mxu0 0.0
      %225 = vmatprep.subr.mxu0 0.0
      %226 = vmatpush1.msra.mxu0 0.0
      %227 = vmatprep.subr.mxu0 0.0
      %228 = vmatpush1.msra.mxu0 0.0
      %229 = vmatprep.subr.mxu0 0.0
      %230 = vmatpush1.msra.mxu0 0.0
      %231 = vmatprep.subr.mxu0 0.0
      %232 = vmatpush1.msra.mxu0 0.0
      %233 = vmatprep.subr.mxu0 0.0
      %234 = vmatpush1.msra.mxu0 0.0
      %235 = vmatprep.subr.mxu0 0.0
      %236 = vmatpush1.msra.mxu0 0.0
      %237 = vmatprep.subr.mxu0 0.0
      %238 = vmatpush1.msra.mxu0 0.0
      %239 = vmatprep.subr.mxu0 0.0
      %240 = vmatpush1.msra.mxu0 0.0
      %241 = vmatprep.subr.mxu0 0.0
      %242 = vmatpush1.msra.mxu0 0.0
      %243 = vmatprep.subr.mxu0 0.0
      %244 = vmatpush1.msra.mxu0 0.0
      %245 = vmatprep.subr.mxu0 0.0
      %246 = vmatpush1.msra.mxu0 0.0
      %247 = vmatprep.subr.mxu0 0.0
      %248 = vmatpush1.msra.mxu0 0.0
      %249 = vmatprep.subr.mxu0 0.0
      %250 = vmatpush1.msra.mxu0 0.0
      %251 = vmatprep.subr.mxu0 0.0
      %252 = vmatpush1.msra.mxu0 %v201
      %253 = vmatprep.subr.mxu0 0.0
      %254 = vmatpush2.msra.mxu0 0.0
      %255 = vmatprep.subr.mxu0 0.0
      %256 = vmatpush2.msra.mxu0 0.0
      %257 = vmatprep.subr.mxu0 0.0
      %258 = vmatpush2.msra.mxu0 0.0
      %259 = vmatprep.subr.mxu0 0.0
      %260 = vmatpush2.msra.mxu0 0.0
      %261 = vmatprep.subr.mxu0 0.0
      %262 = vmatpush2.msra.mxu0 0.0
      %263 = vmatprep.subr.mxu0 0.0
      %264 = vmatpush2.msra.mxu0 0.0
      %265 = vmatprep.subr.mxu0 0.0
      %266 = vmatpush2.msra.mxu0 0.0
      %267 = vmatprep.subr.mxu0 0.0
      %268 = vmatpush2.msra.mxu0 0.0
      %269 = vmatprep.subr.mxu0 0.0
      %270 = vmatpush2.msra.mxu0 0.0
      %271 = vmatprep.subr.mxu0 0.0
      %272 = vmatpush2.msra.mxu0 0.0
      %273 = vmatprep.subr.mxu0 0.0
      %274 = vmatpush2.msra.mxu0 0.0
      %275 = vmatprep.subr.mxu0 0.0
      %276 = vmatpush2.msra.mxu0 0.0
      %277 = vmatprep.subr.mxu0 0.0
      %278 = vmatpush2.msra.mxu0 0.0
      %279 = vmatprep.subr.mxu0 0.0
      %280 = vmatpush2.msra.mxu0 0.0
      %281 = vmatprep.subr.mxu0 0.0
      %282 = vmatpush2.msra.mxu0 0.0
      %283 = vmatprep.subr.mxu0 0.0
      %284 = vmatpush2.msra.mxu0 0.0
      %285 = vmatprep.mubr.f32.mxu0 0.0
      %286 = vmatmul.mubr.f32.gmra.mxu0 %v216
      %v287 = vpop.f32.mrf.mxu0
      %v288 = vadd.f32 %v207, %v287
      %v289 = vpop.f32.mrf.mxu0
      %290 = vmatprep.mubr.f32.mxu0 0.0
      %291 = vmatmul.mubr.f32.gmra.mxu0 %v219
      %v292 = vpop.f32.mrf.mxu0
      %v293 = vadd.f32 %v212, %v292
      %v294 = vpop.f32.mrf.mxu0
      %295 = vdwg.mxu0
      %vm296 = vcmask 523264
      %297 = vst.msk [vmem:[%s198] sm:$0xff] %vm296, %v288
      %298 = vst.msk [vmem:[%s198 + $0x8] sm:$0xff] %vm296, %v293
      %p299 = scmp.lt.s32.totalorder %s18, 1
      %s300 = scalar_select %p299, %s18, 1
      %p301 = scmp.lt.s32.totalorder %s19, 0
      %s302 = scalar_select %p301, %s19, 0
      %s303 = smul.addr %s300, 2
      %s304 = sadd.s32 %s302, %s303
      %s305 = smul.addr %s304, 8
      %s306 = scalar_lea.vmem %s3, %s305
      // Predicated region
      $region33: #{unet_up_forward.1} parent=31 // pred_check
        %p307 = pneg %p116
      $region34: #{unet_up_forward.1} parent=31 // pred_check_branch
        %309 = sbr.rel (%p307) target = $region36
      $region35: #{unet_up_forward.1} parent=31 // pred_region
        _
      $region36: #{unet_up_forward.1} parent=31 // pred_fallthru
        _
    $region32: #{unet_up_forward.1} parent=5 // pred_fallthru
      _
    %p310 = scmp.le.s32.totalorder 2, %s9
    // Predicated region
    $region37: #{unet_up_forward.1} parent=5 // pred_check
      %p311 = pneg %p310
    $region38: #{unet_up_forward.1} parent=5 // pred_check_branch
      %313 = sbr.rel (%p311) target = $region40
    $region39: #{unet_up_forward.1} parent=5 // pred_region
      %s314 = ssub.s32 %s9, 2
      // Predicated region
      $region41: #{unet_up_forward.1} parent=39 // pred_check
        %p315 = pneg %p122
      $region42: #{unet_up_forward.1} parent=39 // pred_check_branch
        %317 = sbr.rel (%p315) target = $region44
      $region43: #{unet_up_forward.1} parent=39 // pred_region
        %p318 = scmp.lt.s32.totalorder %s20, 1
        %s319 = scalar_select %p318, %s20, 1
        %p320 = scmp.lt.s32.totalorder %s21, 0
        %s321 = scalar_select %p320, %s21, 0
        %s322 = smul.addr %s319, 2
        %s323 = sadd.s32 %s321, %s322
        %s324 = smul.addr %s323, 8
        %s325 = scalar_lea.vmem %s3, %s324
      $region44: #{unet_up_forward.1} parent=39 // pred_fallthru
        _
    $region40: #{unet_up_forward.1} parent=5 // pred_fallthru
      _
  $region6: #{unet_up_forward.1} parent=0 // loop_footer
    %s13 = sadd.s32 1, %s9
  $region7: #{unet_up_forward.1} parent=0 // loop_footer_branch
    %8 = sbr.rel target = $region3
  $region8: #{unet_up_forward.1} parent=0 // loop_exit
    _

</llo_original>
